<compile_context>
chip_gen: v5e
topology: v5e:2x2
jax: 0.10.0
libtpu: 0.0.40
codegen_flags: <defaults>
</compile_context>

<pallas_src>
import functools

import jax
import jax.numpy as jnp
from jax import lax
from jax.experimental import pallas as pl
from jax.experimental.pallas import tpu as pltpu


def _final_block_kernel(x_ref, w_ref, b_ref, o_ref):
    # x_ref: (C_in, THW)   w_ref: (C_out, C_in)   b_ref: (C_out, 1)
    # o_ref: (C_out, THW)
    x = x_ref[...].astype(jnp.float32)
    w = w_ref[...].astype(jnp.float32)
    c_out, c_in = w.shape
    thw = x.shape[-1]

    # Fold bias into the f32 accumulator (sublane-aligned, broadcast once).
    acc = jnp.broadcast_to(b_ref[...].astype(jnp.float32), (c_out, thw))

    if c_in <= 8 and c_out <= 16:
        # Tiny contraction: unrolled VPU broadcast-multiply-accumulate.
        # (8,1) lane-broadcast * (1,THW) sublane-broadcast -> (C_out, THW).
        for c in range(c_in):
            acc = acc + w[:, c : c + 1] * x[c : c + 1, :]
    else:
        # Larger heads: single MXU matmul over channels.
        acc = acc + lax.dot_general(
            w, x, (((1,), (0,)), ((), ())),
            preferred_element_type=jnp.float32,
        )

    o_ref[...] = acc.astype(o_ref.dtype)


@functools.partial(jax.jit, static_argnames=("max_tile_hw",))
def final_block_forward(x_nchw, weight_oc, bias, max_tile_hw=2048):
    """FinalBlock with block = Conv2d(C_in, C_out, kernel_size=1, bias=True).

    x_nchw:    [N, C_in, H, W]   (PyTorch NCHW convention)
    weight_oc: [C_out, C_in]     (conv weight [C_out, C_in, 1, 1] squeezed)
    bias:      [C_out]
    returns    [N, C_out, H, W]
    """
    n, c_in, h, w = x_nchw.shape
    c_out = weight_oc.shape[0]
    hw = h * w

    # Free reshape (no transpose): spatial stays on the lane axis.
    x_flat = x_nchw.reshape(n, c_in, hw)
    bias2d = bias.reshape(c_out, 1)

    # Lane-dense tiling of the HW axis: multiple of 128 (or the full axis if
    # it is smaller than one vreg row), capped to keep VMEM use modest.
    if hw >= 128:
        tile_hw = min(max_tile_hw, ((hw + 127) // 128) * 128)
    else:
        tile_hw = hw
    grid = (n, pl.cdiv(hw, tile_hw))

    out_flat = pl.pallas_call(
        _final_block_kernel,
        out_shape=jax.ShapeDtypeStruct((n, c_out, hw), x_nchw.dtype),
        grid_spec=pltpu.PrefetchScalarGridSpec(
            num_scalar_prefetch=0,
            grid=grid,
            in_specs=[
                # batch dim squeezed (None); kernel sees (C_in, tile_hw).
                pl.BlockSpec((None, c_in, tile_hw), lambda b, t: (b, 0, t)),
                # Small weight / bias stay VMEM-resident (constant index_map).
                pl.BlockSpec((c_out, c_in), lambda b, t: (0, 0)),
                pl.BlockSpec((c_out, 1), lambda b, t: (0, 0)),
            ],
            out_specs=pl.BlockSpec((None, c_out, tile_hw), lambda b, t: (b, 0, t)),
        ),
        compiler_params=pltpu.CompilerParams(
            dimension_semantics=("parallel", "parallel"),
        ),
    )(x_flat, weight_oc, bias2d)

    # Free reshape back to NCHW.
    return out_flat.reshape(n, c_out, h, w)


if __name__ == "__main__":
    key = jax.random.PRNGKey(0)
    kx, kw, kb = jax.random.split(key, 3)

    N, C_IN, H, W = 2, 4, 16, 16
    C_OUT = 8

    x = jax.random.normal(kx, (N, C_IN, H, W), dtype=jnp.float32)
    # Deterministic synthetic parameters (shapes from Conv2d(C_IN, C_OUT, 1)):
    # conv weight [C_out, C_in, 1, 1] -> [C_out, C_in] (no transpose needed).
    weight = jax.random.normal(kw, (C_OUT, C_IN), dtype=jnp.float32) * 0.1
    bias = jax.random.normal(kb, (C_OUT,), dtype=jnp.float32) * 0.1

    out = final_block_forward(x, weight, bias)
    out = jax.block_until_ready(out)

    # Pure-JAX reference (1x1 conv == channel matmul) as correctness gate.
    ref = jnp.einsum("nchw,oc->nohw", x, weight) + bias[None, :, None, None]
    assert out.shape == (N, C_OUT, H, W)
    assert jnp.allclose(out, ref, atol=1e-5, rtol=1e-5)

    print("KERNEL_OK")
</pallas_src>

<mosaic_0001>
module attributes {stable_mosaic.version = 11 : i64} {
  func.func @_final_block_kernel(%arg0: i32, %arg1: i32, %arg2: memref<1x4x256xf32, #tpu.memory_space<vmem>>, %arg3: memref<8x4xf32, #tpu.memory_space<vmem>>, %arg4: memref<8x1xf32, #tpu.memory_space<vmem>>, %arg5: memref<1x8x256xf32, #tpu.memory_space<vmem>>) attributes {dimension_semantics = [#tpu.dimension_semantics<parallel>, #tpu.dimension_semantics<parallel>], iteration_bounds = array<i64: 2, 1>, scalar_prefetch = 0 : i64, scratch_operands = 0 : i64, tpu.core_type = #tpu.core_type<tc>, window_params = [{transform_indices = @transform_0, window_bounds = array<i64: 1, 4, 256>}, {pipeline_mode = #tpu.pipeline_mode<synchronous>, transform_indices = @transform_1, window_bounds = array<i64: 8, 4>}, {pipeline_mode = #tpu.pipeline_mode<synchronous>, transform_indices = @transform_2, window_bounds = array<i64: 8, 1>}, {transform_indices = @transform_3, window_bounds = array<i64: 1, 8, 256>}]} {
    %c0 = arith.constant 0 : index
    %c0_0 = arith.constant 0 : index
    %c0_1 = arith.constant 0 : index
    %0 = vector.load %arg2[%c0, %c0_0, %c0_1] : memref<1x4x256xf32, #tpu.memory_space<vmem>>, vector<1x4x256xf32>
    %1 = vector.shape_cast %0 : vector<1x4x256xf32> to vector<4x256xf32>
    %c0_2 = arith.constant 0 : index
    %c0_3 = arith.constant 0 : index
    %2 = vector.load %arg3[%c0_2, %c0_3] : memref<8x4xf32, #tpu.memory_space<vmem>>, vector<8x4xf32>
    %c0_4 = arith.constant 0 : index
    %c0_5 = arith.constant 0 : index
    %3 = vector.load %arg4[%c0_4, %c0_5] : memref<8x1xf32, #tpu.memory_space<vmem>>, vector<8x1xf32>
    %4 = vector.shape_cast %3 : vector<8x1xf32> to vector<8x1xf32>
    %5 = vector.broadcast %4 : vector<8x1xf32> to vector<8x256xf32>
    %6 = vector.extract_strided_slice %2 {offsets = [0, 0], sizes = [8, 1], strides = [1, 1]} : vector<8x4xf32> to vector<8x1xf32>
    %7 = vector.extract_strided_slice %1 {offsets = [0, 0], sizes = [1, 256], strides = [1, 1]} : vector<4x256xf32> to vector<1x256xf32>
    %8 = vector.broadcast %6 : vector<8x1xf32> to vector<8x256xf32>
    %9 = vector.broadcast %7 : vector<1x256xf32> to vector<8x256xf32>
    %10 = arith.mulf %8, %9 : vector<8x256xf32>
    %11 = arith.addf %5, %10 : vector<8x256xf32>
    %12 = vector.extract_strided_slice %2 {offsets = [0, 1], sizes = [8, 1], strides = [1, 1]} : vector<8x4xf32> to vector<8x1xf32>
    %13 = vector.extract_strided_slice %1 {offsets = [1, 0], sizes = [1, 256], strides = [1, 1]} : vector<4x256xf32> to vector<1x256xf32>
    %14 = vector.broadcast %12 : vector<8x1xf32> to vector<8x256xf32>
    %15 = vector.broadcast %13 : vector<1x256xf32> to vector<8x256xf32>
    %16 = arith.mulf %14, %15 : vector<8x256xf32>
    %17 = arith.addf %11, %16 : vector<8x256xf32>
    %18 = vector.extract_strided_slice %2 {offsets = [0, 2], sizes = [8, 1], strides = [1, 1]} : vector<8x4xf32> to vector<8x1xf32>
    %19 = vector.extract_strided_slice %1 {offsets = [2, 0], sizes = [1, 256], strides = [1, 1]} : vector<4x256xf32> to vector<1x256xf32>
    %20 = vector.broadcast %18 : vector<8x1xf32> to vector<8x256xf32>
    %21 = vector.broadcast %19 : vector<1x256xf32> to vector<8x256xf32>
    %22 = arith.mulf %20, %21 : vector<8x256xf32>
    %23 = arith.addf %17, %22 : vector<8x256xf32>
    %24 = vector.extract_strided_slice %2 {offsets = [0, 3], sizes = [8, 1], strides = [1, 1]} : vector<8x4xf32> to vector<8x1xf32>
    %25 = vector.extract_strided_slice %1 {offsets = [3, 0], sizes = [1, 256], strides = [1, 1]} : vector<4x256xf32> to vector<1x256xf32>
    %26 = vector.broadcast %24 : vector<8x1xf32> to vector<8x256xf32>
    %27 = vector.broadcast %25 : vector<1x256xf32> to vector<8x256xf32>
    %28 = arith.mulf %26, %27 : vector<8x256xf32>
    %29 = arith.addf %23, %28 : vector<8x256xf32>
    %c0_6 = arith.constant 0 : index
    %c0_7 = arith.constant 0 : index
    %c0_8 = arith.constant 0 : index
    %30 = vector.load %arg5[%c0_6, %c0_7, %c0_8] : memref<1x8x256xf32, #tpu.memory_space<vmem>>, vector<1x8x256xf32>
    %31 = vector.shape_cast %30 : vector<1x8x256xf32> to vector<8x256xf32>
    %32 = vector.shape_cast %29 : vector<8x256xf32> to vector<1x8x256xf32>
    tpu.vector_store %arg5[%c0_6, %c0_7, %c0_8], %32 {strides = array<i32>} : memref<1x8x256xf32, #tpu.memory_space<vmem>>, vector<1x8x256xf32>,
    return
  }
  func.func @transform_0(%arg0: i32, %arg1: i32) -> (i32, i32, i32) {
    %c0_i32 = arith.constant 0 : i32
    %c0_i32_0 = arith.constant 0 : i32
    return %arg0, %c0_i32, %arg1 : i32, i32, i32
  }
  func.func @transform_1(%arg0: i32, %arg1: i32) -> (i32, i32) {
    %c0_i32 = arith.constant 0 : i32
    %c0_i32_0 = arith.constant 0 : i32
    %c0_i32_1 = arith.constant 0 : i32
    return %c0_i32, %c0_i32_0 : i32, i32
  }
  func.func @transform_2(%arg0: i32, %arg1: i32) -> (i32, i32) {
    %c0_i32 = arith.constant 0 : i32
    %c0_i32_0 = arith.constant 0 : i32
    %c0_i32_1 = arith.constant 0 : i32
    return %c0_i32, %c0_i32_0 : i32, i32
  }
  func.func @transform_3(%arg0: i32, %arg1: i32) -> (i32, i32, i32) {
    %c0_i32 = arith.constant 0 : i32
    %c0_i32_0 = arith.constant 0 : i32
    return %arg0, %c0_i32, %arg1 : i32, i32, i32
  }
}

</mosaic_0001>

<llo_original>
// kernel: final_block_forward.1
$region0: #{final_block_forward.1}
  #allocation0 [shape = 'u32[]', space=smem, size = 0x4, offset = 0x4, fixed_abs, tag = 'smem constant byte address 0x4 - core index']
  #allocation1 [shape = 'u32[72,128]{1,0:T(1,128)}', space=vmem, size = 0x9000, scoped, tag = 'internal scratch']
  %s0 = inlined_call_operand.vmem [shape: f32[2,4,256], index: 0, kind: input, shape index: {}]
  %s1 = inlined_call_operand.vmem [shape: f32[8,4], index: 1, kind: input, shape index: {}]
  %s2 = inlined_call_operand.vmem [shape: f32[8,1], index: 2, kind: input, shape index: {}]
  %s3 = inlined_call_operand.vmem [shape: f32[2,8,256], index: 3, kind: output, shape index: {}]
  %s4 = sld [smem:[#allocation0]]
  $region45: #{final_block_forward.1} parent=0
    _
  %s6 = ssub.s32 1, %s4
  %s7 = scalar_select 0, %s6, %s4
  loop: start=0, step=1, limit=4
  $region2: #{final_block_forward.1} parent=0 // loop_pre_header
    _
  $region3: #{final_block_forward.1} parent=0 // loop_header
    %s9 = sphi 0, %s13
    %p10 = scmp.ge.s32.totalorder %s9, 4
    %s16 = sphi 0, %s28
    %s17 = sphi 0, %s24
    %s18 = sphi 0, %s16
    %s19 = sphi 0, %s17
    %s20 = sphi 0, %s18
    %s21 = sphi 0, %s19
    %s33 = sphi 0, %s35
    %s36 = sphi 0, %s33
    %s37 = sphi 0, %s36
    %s53 = sphi 0, %s37
    %s57 = sphi 0, %s57
    %s59 = sphi 0, %s57
    %s60 = sphi 0, %s59
    %s74 = sphi 0, %s60
    %s78 = sphi 0, %s78
    %s80 = sphi 0, %s78
    %s81 = sphi 0, %s80
    %s95 = sphi 0, %s81
    %s103 = sphi 0, %s105
    %s106 = sphi 0, %s103
    %s107 = sphi 0, %s106
    %s123 = sphi 0, %s107
  $region4: #{final_block_forward.1} parent=0 // loop_header_branch
    %12 = sbr.rel (%p10) target = $region8
  $region5: #{final_block_forward.1} parent=0 // loop_body
    %s14 = ssub.s32 %s9, 1
    %s15 = ssub.s32 %s9, 2
    %s22 = sadd.s32 1, %s17
    %p23 = scmp.ge.s32.totalorder %s22, 1
    %s24 = scalar_select %p23, 0, %s22
    %s25 = sadd.s32 1, %s16
    %s26 = scalar_select %p23, %s25, %s16
    %p27 = scmp.ge.s32.totalorder %s26, 2
    %s28 = scalar_select %p27, 0, %s26
    %s29 = ssub.s32 %s16, %s28
    %s30 = ssub.s32 %s17, %s24
    %s31 = sor.u32 %s29, %s30
    %p32 = scmp.eq.s32.totalorder %s31, 0
    %s34 = sadd.s32 %s33, 1
    %s35 = scalar_select %p32, %s33, %s34
    %p38 = pneg %p32
    %p39 = scmp.eq.s32.totalorder %s9, 1
    %p40 = por %p38, %p39
    %p41 = scmp.ne.s32.totalorder %s33, %s36
    %p42 = scmp.eq.s32.totalorder %s9, 0
    %p43 = por %p41, %p42
    %p44 = scmp.ne.s32.totalorder %s33, %s36
    %p45 = scmp.eq.s32.totalorder %s14, 1
    %p46 = por %p44, %p45
    %p47 = scmp.ne.s32.totalorder %s36, %s37
    %p48 = scmp.eq.s32.totalorder %s14, 0
    %p49 = por %p47, %p48
    %p50 = scmp.ne.s32.totalorder %s36, %s37
    %p51 = scmp.eq.s32.totalorder %s15, 1
    %p52 = por %p50, %p51
    %p54 = scmp.ne.s32.totalorder %s37, %s53
    %p55 = scmp.eq.s32.totalorder %s15, 0
    %p56 = por %p54, %p55
    %s58 = sadd.s32 %s57, 1
    %p61 = scmp.eq.s32.totalorder %s9, 1
    %p62 = scmp.ne.s32.totalorder %s57, %s59
    %p63 = scmp.eq.s32.totalorder %s9, 0
    %p64 = por %p62, %p63
    %p65 = scmp.ne.s32.totalorder %s57, %s59
    %p66 = scmp.eq.s32.totalorder %s14, 1
    %p67 = por %p65, %p66
    %p68 = scmp.ne.s32.totalorder %s59, %s60
    %p69 = scmp.eq.s32.totalorder %s14, 0
    %p70 = por %p68, %p69
    %p71 = scmp.ne.s32.totalorder %s59, %s60
    %p72 = scmp.eq.s32.totalorder %s15, 1
    %p73 = por %p71, %p72
    %p75 = scmp.ne.s32.totalorder %s60, %s74
    %p76 = scmp.eq.s32.totalorder %s15, 0
    %p77 = por %p75, %p76
    %s79 = sadd.s32 %s78, 1
    %p82 = scmp.eq.s32.totalorder %s9, 1
    %p83 = scmp.ne.s32.totalorder %s78, %s80
    %p84 = scmp.eq.s32.totalorder %s9, 0
    %p85 = por %p83, %p84
    %p86 = scmp.ne.s32.totalorder %s78, %s80
    %p87 = scmp.eq.s32.totalorder %s14, 1
    %p88 = por %p86, %p87
    %p89 = scmp.ne.s32.totalorder %s80, %s81
    %p90 = scmp.eq.s32.totalorder %s14, 0
    %p91 = por %p89, %p90
    %p92 = scmp.ne.s32.totalorder %s80, %s81
    %p93 = scmp.eq.s32.totalorder %s15, 1
    %p94 = por %p92, %p93
    %p96 = scmp.ne.s32.totalorder %s81, %s95
    %p97 = scmp.eq.s32.totalorder %s15, 0
    %p98 = por %p96, %p97
    %s99 = ssub.s32 %s16, %s28
    %s100 = ssub.s32 %s17, %s24
    %s101 = sor.u32 %s99, %s100
    %p102 = scmp.eq.s32.totalorder %s101, 0
    %s104 = sadd.s32 %s103, 1
    %s105 = scalar_select %p102, %s103, %s104
    %p108 = pneg %p102
    %p109 = scmp.eq.s32.totalorder %s9, 1
    %p110 = por %p108, %p109
    %p111 = scmp.ne.s32.totalorder %s103, %s106
    %p112 = scmp.eq.s32.totalorder %s9, 0
    %p113 = por %p111, %p112
    %p114 = scmp.ne.s32.totalorder %s103, %s106
    %p115 = scmp.eq.s32.totalorder %s14, 1
    %p116 = por %p114, %p115
    %p117 = scmp.ne.s32.totalorder %s106, %s107
    %p118 = scmp.eq.s32.totalorder %s14, 0
    %p119 = por %p117, %p118
    %p120 = scmp.ne.s32.totalorder %s106, %s107
    %p121 = scmp.eq.s32.totalorder %s15, 1
    %p122 = por %p120, %p121
    %p124 = scmp.ne.s32.totalorder %s107, %s123
    %p125 = scmp.eq.s32.totalorder %s15, 0
    %p126 = por %p124, %p125
    %p127 = scmp.le.s32.totalorder 1, %s9
    %p128 = scmp.lt.s32.totalorder %s9, 3
    %p129 = pnand %p127, %p128
    %p130 = pneg %p129
    // Predicated region
    $region9: #{final_block_forward.1} parent=5 // pred_check
      _
    $region10: #{final_block_forward.1} parent=5 // pred_check_branch
      %132 = sbr.rel (%p129) target = $region12
    $region11: #{final_block_forward.1} parent=5 // pred_region
      %s133 = ssub.s32 %s9, 1
      // Predicated region
      $region13: #{final_block_forward.1} parent=11 // pred_check
        %p134 = pneg %p70
      $region14: #{final_block_forward.1} parent=11 // pred_check_branch
        %136 = sbr.rel (%p134) target = $region16
      $region15: #{final_block_forward.1} parent=11 // pred_region
        _
      $region16: #{final_block_forward.1} parent=11 // pred_fallthru
        _
      // Predicated region
      $region17: #{final_block_forward.1} parent=11 // pred_check
        %p137 = pneg %p91
      $region18: #{final_block_forward.1} parent=11 // pred_check_branch
        %139 = sbr.rel (%p137) target = $region20
      $region19: #{final_block_forward.1} parent=11 // pred_region
        _
      $region20: #{final_block_forward.1} parent=11 // pred_fallthru
        _
    $region12: #{final_block_forward.1} parent=5 // pred_fallthru
      _
    %p140 = scmp.lt.s32.totalorder %s9, 2
    // Predicated region
    $region21: #{final_block_forward.1} parent=5 // pred_check
      %p141 = pneg %p140
    $region22: #{final_block_forward.1} parent=5 // pred_check_branch
      %143 = sbr.rel (%p141) target = $region24
    $region23: #{final_block_forward.1} parent=5 // pred_region
      // Predicated region
      $region25: #{final_block_forward.1} parent=23 // pred_check
        %p144 = pneg %p43
      $region26: #{final_block_forward.1} parent=23 // pred_check_branch
        %146 = sbr.rel (%p144) target = $region28
      $region27: #{final_block_forward.1} parent=23 // pred_region
        %s147 = smul.u32 2, %s17
        %p148 = scmp.lt.s32.totalorder %s16, 1
        %s149 = scalar_select %p148, %s16, 1
        %p150 = scmp.lt.s32.totalorder %s147, 1
        %s151 = scalar_select %p150, %s147, 1
        %s152 = smul.addr %s149, 2
        %s153 = sadd.s32 %s151, %s152
        %s154 = smul.addr %s153, 4
        %s155 = scalar_lea.vmem %s0, %s154
        %s156 = smul.u32 2, %s17
      $region28: #{final_block_forward.1} parent=23 // pred_fallthru
        _
    $region24: #{final_block_forward.1} parent=5 // pred_fallthru
      _
    %p157 = scmp.le.s32.totalorder 1, %s9
    %p158 = scmp.lt.s32.totalorder %s9, 3
    %p159 = pnand %p157, %p158
    %p160 = pneg %p159
    // Predicated region
    $region29: #{final_block_forward.1} parent=5 // pred_check
      _
    $region30: #{final_block_forward.1} parent=5 // pred_check_branch
      %162 = sbr.rel (%p159) target = $region32
    $region31: #{final_block_forward.1} parent=5 // pred_region
      %s163 = ssub.s32 %s9, 1
      %s164 = smul.u32 2, %s19
      %p165 = scmp.lt.s32.totalorder %s18, 1
      %s166 = scalar_select %p165, %s18, 1
      %p167 = scmp.lt.s32.totalorder %s164, 1
      %s168 = scalar_select %p167, %s164, 1
      %s169 = smul.addr %s166, 2
      %s170 = sadd.s32 %s168, %s169
      %s171 = smul.addr %s170, 4
      %s172 = scalar_lea.vmem %s0, %s171
      %p173 = pneg %p49
      %p174 = pneg %p46
      %p175 = pneg %p70
      %p176 = pneg %p67
      %p177 = pneg %p91
      %p178 = pneg %p88
      %p179 = pneg %p119
      %p180 = pneg %p116
      %s181 = smul.u32 2, %s19
      %p182 = scmp.lt.s32.totalorder %s18, 1
      %s183 = scalar_select %p182, %s18, 1
      %p184 = scmp.lt.s32.totalorder %s181, 1
      %s185 = scalar_select %p184, %s181, 1
      %s186 = smul.addr %s183, 2
      %s187 = sadd.s32 %s185, %s186
      %s188 = smul.addr %s187, 8
      %s189 = scalar_lea.vmem %s3, %s188
      %s190 = smul.u32 2, %s19
      %p191 = scmp.lt.s32.totalorder %s18, 1
      %s192 = scalar_select %p191, %s18, 1
      %p193 = scmp.lt.s32.totalorder %s190, 1
      %s194 = scalar_select %p193, %s190, 1
      %s195 = smul.addr %s192, 2
      %s196 = sadd.s32 %s194, %s195
      %s197 = smul.addr %s196, 4
      %s198 = scalar_lea.vmem %s0, %s197
      %s199 = smul.u32 2, %s19
      %s200 = smul.u32 2, %s19
      %p201 = scmp.lt.s32.totalorder %s18, 1
      %s202 = scalar_select %p201, %s18, 1
      %p203 = scmp.lt.s32.totalorder %s200, 1
      %s204 = scalar_select %p203, %s200, 1
      %s205 = smul.addr %s202, 2
      %s206 = sadd.s32 %s204, %s205
      %s207 = smul.addr %s206, 8
      %s208 = scalar_lea.vmem %s3, %s207
      %s209 = smul.u32 2, %s19
      %v210 = vld [vmem:[%s198] sm:$0xff]
      %v211 = vld [vmem:[%s1] sm:$0xff]
      %v212 = vld [vmem:[%s2] sm:$0xff]
      %214 = vset.pattern.permute.xlu0 0
      %215 = vperm.xlu0 %214, %v212
      %v216 = vpop.permute.xlu0 %215
      %219 = vset.pattern.permute.xlu0 0
      %220 = vperm.xlu0 %219, %v211
      %v221 = vpop.permute.xlu0 %220
      %v224 = vperm.slane %v210, 0
      %v225 = vperm.slane %v210, 4
      %v228 = vperm.slane %v224, 0
      %v229 = vperm.slane %v225, 0
      %v230 = vmul.f32 %v221, %v228
      %v231 = vmul.f32 %v221, %v229
      %v232 = vadd.f32 %v216, %v230
      %v233 = vadd.f32 %v216, %v231
      %234 = vset.pattern.permute.xlu0 1
      %235 = vperm.xlu0 %234, %v211
      %v236 = vpop.permute.xlu0 %235
      %v238 = vperm.slane %v210, 1
      %v239 = vperm.slane %v210, 5
      %v242 = vperm.slane %v238, 1
      %v243 = vperm.slane %v239, 1
      %v244 = vmul.f32 %v236, %v242
      %v245 = vmul.f32 %v236, %v243
      %v246 = vadd.f32 %v232, %v244
      %v247 = vadd.f32 %v233, %v245
      %248 = vset.pattern.permute.xlu0 2
      %249 = vperm.xlu0 %248, %v211
      %v250 = vpop.permute.xlu0 %249
      %v252 = vperm.slane %v210, 2
      %v253 = vperm.slane %v210, 6
      %v256 = vperm.slane %v252, 2
      %v257 = vperm.slane %v253, 2
      %v258 = vmul.f32 %v250, %v256
      %v259 = vmul.f32 %v250, %v257
      %v260 = vadd.f32 %v246, %v258
      %v261 = vadd.f32 %v247, %v259
      %262 = vset.pattern.permute.xlu0 3
      %263 = vperm.xlu0 %262, %v211
      %v264 = vpop.permute.xlu0 %263
      %v266 = vperm.slane %v210, 3
      %v267 = vperm.slane %v210, 7
      %v270 = vperm.slane %v266, 3
      %v271 = vperm.slane %v267, 3
      %v272 = vmul.f32 %v264, %v270
      %v273 = vmul.f32 %v264, %v271
      %v274 = vadd.f32 %v260, %v272
      %v275 = vadd.f32 %v261, %v273
      %276 = vst [vmem:[%s208] sm:$0xff] %v274
      %277 = vst [vmem:[%s208 + $0x8] sm:$0xff] %v275
      %s278 = smul.u32 2, %s19
      %p279 = scmp.lt.s32.totalorder %s18, 1
      %s280 = scalar_select %p279, %s18, 1
      %p281 = scmp.lt.s32.totalorder %s278, 1
      %s282 = scalar_select %p281, %s278, 1
      %s283 = smul.addr %s280, 2
      %s284 = sadd.s32 %s282, %s283
      %s285 = smul.addr %s284, 8
      %s286 = scalar_lea.vmem %s3, %s285
      // Predicated region
      $region33: #{final_block_forward.1} parent=31 // pred_check
        %p287 = pneg %p116
      $region34: #{final_block_forward.1} parent=31 // pred_check_branch
        %289 = sbr.rel (%p287) target = $region36
      $region35: #{final_block_forward.1} parent=31 // pred_region
        %s290 = smul.u32 2, %s19
      $region36: #{final_block_forward.1} parent=31 // pred_fallthru
        _
    $region32: #{final_block_forward.1} parent=5 // pred_fallthru
      _
    %p291 = scmp.le.s32.totalorder 2, %s9
    // Predicated region
    $region37: #{final_block_forward.1} parent=5 // pred_check
      %p292 = pneg %p291
    $region38: #{final_block_forward.1} parent=5 // pred_check_branch
      %294 = sbr.rel (%p292) target = $region40
    $region39: #{final_block_forward.1} parent=5 // pred_region
      %s295 = ssub.s32 %s9, 2
      // Predicated region
      $region41: #{final_block_forward.1} parent=39 // pred_check
        %p296 = pneg %p122
      $region42: #{final_block_forward.1} parent=39 // pred_check_branch
        %298 = sbr.rel (%p296) target = $region44
      $region43: #{final_block_forward.1} parent=39 // pred_region
        %s299 = smul.u32 2, %s21
        %p300 = scmp.lt.s32.totalorder %s20, 1
        %s301 = scalar_select %p300, %s20, 1
        %p302 = scmp.lt.s32.totalorder %s299, 1
        %s303 = scalar_select %p302, %s299, 1
        %s304 = smul.addr %s301, 2
        %s305 = sadd.s32 %s303, %s304
        %s306 = smul.addr %s305, 8
        %s307 = scalar_lea.vmem %s3, %s306
      $region44: #{final_block_forward.1} parent=39 // pred_fallthru
        _
    $region40: #{final_block_forward.1} parent=5 // pred_fallthru
      _
  $region6: #{final_block_forward.1} parent=0 // loop_footer
    %s13 = sadd.s32 1, %s9
  $region7: #{final_block_forward.1} parent=0 // loop_footer_branch
    %8 = sbr.rel target = $region3
  $region8: #{final_block_forward.1} parent=0 // loop_exit
    _

</llo_original>
